<compile_context>
chip_gen: v6e
topology: v6e:2x2x1
jax: 0.10.0
libtpu: 0.0.40
codegen_flags: <defaults>
</compile_context>

<pallas_src>
import functools
from itertools import combinations

import jax
import jax.numpy as jnp
import numpy as np
from jax import lax
from jax.experimental import pallas as pl
from jax.experimental.pallas import tpu as pltpu


def _contrastive_tile_kernel(margin, n_valid, blk,
                             ei_ref, ej_ref, labc_ref, labr_ref,
                             sqc_ref, sqr_ref, out_ref):
    i = pl.program_id(0)
    j = pl.program_id(1)

    # Per-i-block accumulator: zero it at the start of each j sweep.
    @pl.when(j == 0)
    def _init():
        out_ref[...] = jnp.zeros_like(out_ref)

    # Blocks strictly below the diagonal contain no (col > row) pairs: skip
    # all MXU + elementwise work for them.
    @pl.when(j >= i)
    def _compute():
        # Gram tile on the MXU, contracting the feature dim of both operands
        # directly (no explicit transpose of the j tile).
        gram = lax.dot_general(
            ei_ref[...], ej_ref[...],
            dimension_numbers=(((1,), (1,)), ((), ())),
            preferred_element_type=jnp.float32)                      # (blk, blk)

        # ||e_i - e_j||^2 from precomputed squared row norms.
        dist2 = jnp.maximum(sqc_ref[...] + sqr_ref[...] - 2.0 * gram, 0.0)
        dist = jnp.sqrt(dist2)                                       # EUP slot
        neg_vals = jnp.square(jnp.maximum(margin - dist, 0.0))

        same = labc_ref[...] == labr_ref[...]                        # (blk, blk)
        vals = jnp.where(same, dist2, neg_vals)

        # Global pair mask: strict upper triangle, valid columns only
        # (col > row and col < n_valid implies row < n_valid too).
        row = i * blk + lax.broadcasted_iota(jnp.int32, (blk, blk), 0)
        col = j * blk + lax.broadcasted_iota(jnp.int32, (blk, blk), 1)
        mask = jnp.logical_and(col > row, col < n_valid)

        # One fused reduction per tile into the lane-dense (1, 1, blk)
        # per-i-block accumulator.
        part = jnp.sum(jnp.where(mask, vals, 0.0), axis=0, keepdims=True)
        out_ref[...] += part.reshape(1, 1, blk)


def online_contrastive_loss(embeddings, target, margin, block=128):
    """embeddings: (N, D), target: (N,) integer labels, margin: float."""
    n, d = embeddings.shape
    assert n >= 2, "need at least two embeddings to form a pair"
    blk = block
    n_pad = ((n + blk - 1) // blk) * blk
    pad = n_pad - n

    emb = jnp.pad(embeddings, ((0, pad), (0, 0)))
    lab = jnp.pad(target.astype(jnp.int32), (0, pad), constant_values=-1)

    # Squared row norms (f32) precomputed once in the wrapper.
    emb_f32 = emb.astype(jnp.float32)
    sq = jnp.sum(emb_f32 * emb_f32, axis=-1, keepdims=True)          # (n_pad, 1)

    lab_col = lab.reshape(n_pad, 1)
    lab_row = lab.reshape(1, n_pad)
    sq_col = sq
    sq_row = sq.reshape(1, n_pad)

    nb = n_pad // blk
    kernel = functools.partial(_contrastive_tile_kernel,
                               float(margin), int(n), int(blk))

    # j-dependent tiles: clamp the block index to max(i, j) so the skipped
    # sub-diagonal steps keep re-using the block already resident in VMEM
    # (Pallas does not re-DMA when consecutive block indices are equal).
    jmap_tile = lambda i, j: (jnp.maximum(i, j), 0)
    jmap_row = lambda i, j: (0, jnp.maximum(i, j))

    partials = pl.pallas_call(
        kernel,
        out_shape=jax.ShapeDtypeStruct((nb, 1, blk), jnp.float32),
        grid=(nb, nb),
        in_specs=[
            pl.BlockSpec((blk, d), lambda i, j: (i, 0)),   # embeddings, i tile
            pl.BlockSpec((blk, d), jmap_tile),             # embeddings, j tile
            pl.BlockSpec((blk, 1), lambda i, j: (i, 0)),   # labels (col)
            pl.BlockSpec((1, blk), jmap_row),              # labels (row)
            pl.BlockSpec((blk, 1), lambda i, j: (i, 0)),   # sq norms (col)
            pl.BlockSpec((1, blk), jmap_row),              # sq norms (row)
        ],
        # Per-i-block accumulator, resident across the j (reduction) sweep.
        out_specs=pl.BlockSpec((1, 1, blk), lambda i, j: (i, 0, 0)),
        compiler_params=pltpu.CompilerParams(
            dimension_semantics=("parallel", "arbitrary")),
    )(emb, emb, lab_col, lab_row, sq_col, sq_row)

    # Pair count is a compile-time constant: mean over all i<j pairs.
    cnt = n * (n - 1) // 2
    return jnp.sum(partials) * (1.0 / float(cnt))


def _reference(embeddings, target, margin):
    """NumPy reference mirroring the PyTorch forward (all-pairs selector)."""
    e = np.asarray(embeddings, dtype=np.float32)
    t = np.asarray(target)
    n = e.shape[0]
    pos, neg = [], []
    for i, j in combinations(range(n), 2):
        (pos if t[i] == t[j] else neg).append((i, j))
    pos_loss = [float(np.sum((e[i] - e[j]) ** 2)) for i, j in pos]
    neg_loss = [float(max(margin - np.sqrt(np.sum((e[i] - e[j]) ** 2)), 0.0) ** 2)
                for i, j in neg]
    allv = pos_loss + neg_loss
    return float(np.mean(allv))


if __name__ == "__main__":
    key = jax.random.PRNGKey(0)
    margin = 1.0

    # Small single-block case (module-scale example shapes).
    k1, k2, k3, k4 = jax.random.split(key, 4)
    N, D = 8, 32
    embeddings = jax.random.normal(k1, (N, D), dtype=jnp.float32)
    target = jax.random.randint(k2, (N,), 0, 3, dtype=jnp.int32)
    loss = jax.block_until_ready(online_contrastive_loss(embeddings, target, margin))
    ref = _reference(embeddings, target, margin)
    assert abs(float(loss) - ref) <= 1e-3 * max(1.0, abs(ref)), (float(loss), ref)

    # Multi-block case (exercises the 2x2 block grid, triangle skip,
    # clamped index maps and per-i-block partial accumulators).
    N2, D2 = 200, 32
    embeddings2 = jax.random.normal(k3, (N2, D2), dtype=jnp.float32)
    target2 = jax.random.randint(k4, (N2,), 0, 3, dtype=jnp.int32)
    loss2 = jax.block_until_ready(online_contrastive_loss(embeddings2, target2, margin))
    ref2 = _reference(embeddings2, target2, margin)
    assert abs(float(loss2) - ref2) <= 1e-3 * max(1.0, abs(ref2)), (float(loss2), ref2)

    print("KERNEL_OK")
</pallas_src>

<mosaic_0001>
module attributes {stable_mosaic.version = 11 : i64} {
  func.func @_contrastive_tile_kernel(%arg0: i32, %arg1: i32, %arg2: memref<128x32xf32, #tpu.memory_space<vmem>>, %arg3: memref<128x32xf32, #tpu.memory_space<vmem>>, %arg4: memref<128x1xi32, #tpu.memory_space<vmem>>, %arg5: memref<1x128xi32, #tpu.memory_space<vmem>>, %arg6: memref<128x1xf32, #tpu.memory_space<vmem>>, %arg7: memref<1x128xf32, #tpu.memory_space<vmem>>, %arg8: memref<1x1x128xf32, #tpu.memory_space<vmem>>) attributes {dimension_semantics = [#tpu.dimension_semantics<parallel>, #tpu.dimension_semantics<arbitrary>], iteration_bounds = array<i64: 1, 1>, scalar_prefetch = 0 : i64, scratch_operands = 0 : i64, tpu.core_type = #tpu.core_type<tc>, window_params = [{transform_indices = @transform_0, window_bounds = array<i64: 128, 32>}, {transform_indices = @transform_1, window_bounds = array<i64: 128, 32>}, {transform_indices = @transform_2, window_bounds = array<i64: 128, 1>}, {transform_indices = @transform_3, window_bounds = array<i64: 1, 128>}, {transform_indices = @transform_4, window_bounds = array<i64: 128, 1>}, {transform_indices = @transform_5, window_bounds = array<i64: 1, 128>}, {transform_indices = @transform_6, window_bounds = array<i64: 1, 1, 128>}]} {
    %c0_i32 = arith.constant 0 : i32
    %0 = arith.cmpi eq, %arg1, %c0_i32 : i32
    %1 = arith.extui %0 : i1 to i32
    %c0_i32_0 = arith.constant 0 : i32
    %2 = arith.cmpi ne, %1, %c0_i32_0 : i32
    scf.if %2 {
      %cst = arith.constant 0.000000e+00 : f32
      %6 = vector.broadcast %cst : f32 to vector<1x1x128xf32>
      %c0 = arith.constant 0 : index
      %c0_2 = arith.constant 0 : index
      %c0_3 = arith.constant 0 : index
      %7 = vector.load %arg8[%c0, %c0_2, %c0_3] : memref<1x1x128xf32, #tpu.memory_space<vmem>>, vector<1x1x128xf32>
      tpu.vector_store %arg8[%c0, %c0_2, %c0_3], %6 {strides = array<i32>} : memref<1x1x128xf32, #tpu.memory_space<vmem>>, vector<1x1x128xf32>,
    } else {
    }
    %3 = arith.cmpi sge, %arg1, %arg0 : i32
    %4 = arith.extui %3 : i1 to i32
    %c0_i32_1 = arith.constant 0 : i32
    %5 = arith.cmpi ne, %4, %c0_i32_1 : i32
    scf.if %5 {
      %c0 = arith.constant 0 : index
      %c0_2 = arith.constant 0 : index
      %6 = vector.load %arg2[%c0, %c0_2] : memref<128x32xf32, #tpu.memory_space<vmem>>, vector<128x32xf32>
      %c0_3 = arith.constant 0 : index
      %c0_4 = arith.constant 0 : index
      %7 = vector.load %arg3[%c0_3, %c0_4] : memref<128x32xf32, #tpu.memory_space<vmem>>, vector<128x32xf32>
      %cst = arith.constant dense<0.000000e+00> : vector<128x128xf32>
      %8 = tpu.matmul %6, %7, %cst {dimension_numbers = #tpu.dot_dimension_numbers<[1], [1], [0], [0], [0, 0, 1, 0], [], []>} : vector<128x32xf32>, vector<128x32xf32>, vector<128x128xf32> -> vector<128x128xf32>
      %c0_5 = arith.constant 0 : index
      %c0_6 = arith.constant 0 : index
      %9 = vector.load %arg6[%c0_5, %c0_6] : memref<128x1xf32, #tpu.memory_space<vmem>>, vector<128x1xf32>
      %c0_7 = arith.constant 0 : index
      %c0_8 = arith.constant 0 : index
      %10 = vector.load %arg7[%c0_7, %c0_8] : memref<1x128xf32, #tpu.memory_space<vmem>>, vector<1x128xf32>
      %11 = vector.broadcast %9 : vector<128x1xf32> to vector<128x128xf32>
      %12 = vector.broadcast %10 : vector<1x128xf32> to vector<128x128xf32>
      %13 = arith.addf %11, %12 : vector<128x128xf32>
      %cst_9 = arith.constant 2.000000e+00 : f32
      %14 = vector.broadcast %cst_9 : f32 to vector<128x128xf32>
      %15 = arith.mulf %14, %8 : vector<128x128xf32>
      %16 = arith.subf %13, %15 : vector<128x128xf32>
      %cst_10 = arith.constant 0.000000e+00 : f32
      %17 = vector.broadcast %cst_10 : f32 to vector<128x128xf32>
      %18 = arith.maximumf %16, %17 : vector<128x128xf32>
      %19 = math.sqrt %18 : vector<128x128xf32>
      %cst_11 = arith.constant 1.000000e+00 : f32
      %20 = vector.broadcast %cst_11 : f32 to vector<128x128xf32>
      %21 = arith.subf %20, %19 : vector<128x128xf32>
      %cst_12 = arith.constant 0.000000e+00 : f32
      %22 = vector.broadcast %cst_12 : f32 to vector<128x128xf32>
      %23 = arith.maximumf %21, %22 : vector<128x128xf32>
      %24 = arith.mulf %23, %23 : vector<128x128xf32>
      %c0_13 = arith.constant 0 : index
      %c0_14 = arith.constant 0 : index
      %25 = vector.load %arg4[%c0_13, %c0_14] : memref<128x1xi32, #tpu.memory_space<vmem>>, vector<128x1xi32>
      %c0_15 = arith.constant 0 : index
      %c0_16 = arith.constant 0 : index
      %26 = vector.load %arg5[%c0_15, %c0_16] : memref<1x128xi32, #tpu.memory_space<vmem>>, vector<1x128xi32>
      %27 = vector.broadcast %25 : vector<128x1xi32> to vector<128x128xi32>
      %28 = vector.broadcast %26 : vector<1x128xi32> to vector<128x128xi32>
      %29 = arith.cmpi eq, %27, %28 : vector<128x128xi32>
      %30 = arith.select %29, %18, %24 : vector<128x128xi1>, vector<128x128xf32>
      %c128_i32 = arith.constant 128 : i32
      %31 = arith.muli %arg0, %c128_i32 : i32
      %32 = tpu.iota {dimensions = array<i32: 0>} : vector<128x128xi32>
      %33 = vector.broadcast %31 : i32 to vector<128x128xi32>
      %34 = arith.addi %33, %32 : vector<128x128xi32>
      %c128_i32_17 = arith.constant 128 : i32
      %35 = arith.muli %arg1, %c128_i32_17 : i32
      %36 = tpu.iota {dimensions = array<i32: 1>} : vector<128x128xi32>
      %37 = vector.broadcast %35 : i32 to vector<128x128xi32>
      %38 = arith.addi %37, %36 : vector<128x128xi32>
      %39 = arith.cmpi sgt, %38, %34 : vector<128x128xi32>
      %c8_i32 = arith.constant 8 : i32
      %40 = vector.broadcast %c8_i32 : i32 to vector<128x128xi32>
      %41 = arith.cmpi slt, %38, %40 : vector<128x128xi32>
      %42 = arith.andi %39, %41 : vector<128x128xi1>
      %cst_18 = arith.constant 0.000000e+00 : f32
      %43 = vector.broadcast %cst_18 : f32 to vector<128x128xf32>
      %44 = arith.select %42, %30, %43 : vector<128x128xi1>, vector<128x128xf32>
      %cst_19 = arith.constant dense<0.000000e+00> : vector<128xf32>
      %45 = vector.multi_reduction <add>, %44, %cst_19 [0] : vector<128x128xf32> to vector<128xf32>
      %46 = vector.shape_cast %45 : vector<128xf32> to vector<1x128xf32>
      %c0_20 = arith.constant 0 : index
      %c0_21 = arith.constant 0 : index
      %c0_22 = arith.constant 0 : index
      %47 = vector.load %arg8[%c0_20, %c0_21, %c0_22] : memref<1x1x128xf32, #tpu.memory_space<vmem>>, vector<1x1x128xf32>
      %48 = vector.shape_cast %46 : vector<1x128xf32> to vector<1x1x128xf32>
      %49 = arith.addf %47, %48 : vector<1x1x128xf32>
      %c0_23 = arith.constant 0 : index
      %c0_24 = arith.constant 0 : index
      %c0_25 = arith.constant 0 : index
      %50 = vector.load %arg8[%c0_23, %c0_24, %c0_25] : memref<1x1x128xf32, #tpu.memory_space<vmem>>, vector<1x1x128xf32>
      tpu.vector_store %arg8[%c0_23, %c0_24, %c0_25], %49 {strides = array<i32>} : memref<1x1x128xf32, #tpu.memory_space<vmem>>, vector<1x1x128xf32>,
    } else {
    }
    return
  }
  func.func @transform_0(%arg0: i32, %arg1: i32) -> (i32, i32) {
    %c0_i32 = arith.constant 0 : i32
    %c0_i32_0 = arith.constant 0 : i32
    return %arg0, %c0_i32 : i32, i32
  }
  func.func @transform_1(%arg0: i32, %arg1: i32) -> (i32, i32) {
    %0 = arith.maxsi %arg0, %arg1 : i32
    %c0_i32 = arith.constant 0 : i32
    %c0_i32_0 = arith.constant 0 : i32
    return %0, %c0_i32 : i32, i32
  }
  func.func @transform_2(%arg0: i32, %arg1: i32) -> (i32, i32) {
    %c0_i32 = arith.constant 0 : i32
    %c0_i32_0 = arith.constant 0 : i32
    return %arg0, %c0_i32 : i32, i32
  }
  func.func @transform_3(%arg0: i32, %arg1: i32) -> (i32, i32) {
    %0 = arith.maxsi %arg0, %arg1 : i32
    %c0_i32 = arith.constant 0 : i32
    %c0_i32_0 = arith.constant 0 : i32
    return %c0_i32, %0 : i32, i32
  }
  func.func @transform_4(%arg0: i32, %arg1: i32) -> (i32, i32) {
    %c0_i32 = arith.constant 0 : i32
    %c0_i32_0 = arith.constant 0 : i32
    return %arg0, %c0_i32 : i32, i32
  }
  func.func @transform_5(%arg0: i32, %arg1: i32) -> (i32, i32) {
    %0 = arith.maxsi %arg0, %arg1 : i32
    %c0_i32 = arith.constant 0 : i32
    %c0_i32_0 = arith.constant 0 : i32
    return %c0_i32, %0 : i32, i32
  }
  func.func @transform_6(%arg0: i32, %arg1: i32) -> (i32, i32, i32) {
    %c0_i32 = arith.constant 0 : i32
    %c0_i32_0 = arith.constant 0 : i32
    %c0_i32_1 = arith.constant 0 : i32
    return %arg0, %c0_i32, %c0_i32_0 : i32, i32, i32
  }
}

</mosaic_0001>

<llo_original>
// kernel: tpu_custom_call.1
$region0: #{tpu_custom_call.1}
  #allocation0 [shape = 'u32[]', space=smem, size = 0x4, offset = 0x4, fixed_abs, tag = 'smem constant byte address 0x4 - core index']
  #allocation1 [shape = 'u32[144,128]{1,0:T(1,128)}', space=vmem, size = 0x12000, scoped, tag = 'internal scratch']
  %s0 = inlined_call_operand.vmem [shape: f32[128,32], index: 0, kind: input, shape index: {}]
  %s1 = inlined_call_operand.vmem [shape: f32[128,32], index: 1, kind: input, shape index: {}]
  %s2 = inlined_call_operand.vmem [shape: s32[128,1], index: 2, kind: input, shape index: {}]
  %s3 = inlined_call_operand.vmem [shape: s32[1,128], index: 3, kind: input, shape index: {}]
  %s4 = inlined_call_operand.vmem [shape: f32[128,1], index: 4, kind: input, shape index: {}]
  %s5 = inlined_call_operand.vmem [shape: f32[1,128], index: 5, kind: input, shape index: {}]
  %s6 = inlined_call_operand.hbm [shape: f32[1,1,128], index: 6, kind: output, shape index: {}]
  %s7 = sld [smem:[#allocation0]]
  $region42: #{tpu_custom_call.1} parent=0
    _
  %s9 = ssub.s32 1, %s7
  %s10 = scalar_select 0, %s9, %s7
  $region1: #{tpu_custom_call.1} parent=0
    #allocation2 [shape = 'u8[512]{0}', space=vmem, size = 0x400, scoped, tag = 'output window, operand 0, single buffered']
    #allocation3 [shape = 's32[1]{0}', space=sflag, size = 0x4, scoped, tag = 'scoped memory for tpu_custom_call.1']
    %11 = vsyncpa [#allocation3], 0
    // Predicated region
    $region2: #{tpu_custom_call.1} parent=1 // pred_check
      _
    $region3: #{tpu_custom_call.1} parent=1 // pred_check_branch
      %13 = sbr.rel (0) target = $region5
    $region4: #{tpu_custom_call.1} parent=1 // pred_region
      _
    $region5: #{tpu_custom_call.1} parent=1 // pred_fallthru
      _
    // Predicated region
    $region6: #{tpu_custom_call.1} parent=1 // pred_check
      _
    $region7: #{tpu_custom_call.1} parent=1 // pred_check_branch
      %15 = sbr.rel (0) target = $region9
    $region8: #{tpu_custom_call.1} parent=1 // pred_region
      _
    $region9: #{tpu_custom_call.1} parent=1 // pred_fallthru
      _
    // Predicated region
    $region10: #{tpu_custom_call.1} parent=1 // pred_check
      _
    $region11: #{tpu_custom_call.1} parent=1 // pred_check_branch
      %17 = sbr.rel (0) target = $region13
    $region12: #{tpu_custom_call.1} parent=1 // pred_region
      _
    $region13: #{tpu_custom_call.1} parent=1 // pred_fallthru
      _
    // Predicated region
    $region14: #{tpu_custom_call.1} parent=1 // pred_check
      _
    $region15: #{tpu_custom_call.1} parent=1 // pred_check_branch
      %19 = sbr.rel (0) target = $region17
    $region16: #{tpu_custom_call.1} parent=1 // pred_region
      _
    $region17: #{tpu_custom_call.1} parent=1 // pred_fallthru
      _
    // Predicated region
    $region18: #{tpu_custom_call.1} parent=1 // pred_check
      _
    $region19: #{tpu_custom_call.1} parent=1 // pred_check_branch
      %21 = sbr.rel (0) target = $region21
    $region20: #{tpu_custom_call.1} parent=1 // pred_region
      _
    $region21: #{tpu_custom_call.1} parent=1 // pred_fallthru
      _
    // Predicated region
    $region22: #{tpu_custom_call.1} parent=1 // pred_check
      _
    $region23: #{tpu_custom_call.1} parent=1 // pred_check_branch
      %23 = sbr.rel (0) target = $region25
    $region24: #{tpu_custom_call.1} parent=1 // pred_region
      _
    $region25: #{tpu_custom_call.1} parent=1 // pred_fallthru
      _
    %p24 = scmp.eq.s32.totalorder 0, 0
    // Predicated region
    $region26: #{tpu_custom_call.1} parent=1 // pred_check
      %p25 = pneg %p24
    $region27: #{tpu_custom_call.1} parent=1 // pred_check_branch
      %27 = sbr.rel (%p25) target = $region29
    $region28: #{tpu_custom_call.1} parent=1 // pred_region
      %28 = vst [vmem:[#allocation2] sm:$0x1] 0.0
    $region29: #{tpu_custom_call.1} parent=1 // pred_fallthru
      _
    %p29 = scmp.ge.s32.totalorder 0, 0
    // Predicated region
    $region30: #{tpu_custom_call.1} parent=1 // pred_check
      %p30 = pneg %p29
    $region31: #{tpu_custom_call.1} parent=1 // pred_check_branch
      %32 = sbr.rel (%p30) target = $region33
    $region32: #{tpu_custom_call.1} parent=1 // pred_region
      %v33 = vld [vmem:[%s0] sm:$0xff]
      %v34 = vld [vmem:[%s0 + $0x8] sm:$0xff]
      %v35 = vld [vmem:[%s0 + $0x10] sm:$0xff]
      %v36 = vld [vmem:[%s0 + $0x18] sm:$0xff]
      %v37 = vld [vmem:[%s0 + $0x20] sm:$0xff]
      %v38 = vld [vmem:[%s0 + $0x28] sm:$0xff]
      %v39 = vld [vmem:[%s0 + $0x30] sm:$0xff]
      %v40 = vld [vmem:[%s0 + $0x38] sm:$0xff]
      %v41 = vld [vmem:[%s0 + $0x40] sm:$0xff]
      %v42 = vld [vmem:[%s0 + $0x48] sm:$0xff]
      %v43 = vld [vmem:[%s0 + $0x50] sm:$0xff]
      %v44 = vld [vmem:[%s0 + $0x58] sm:$0xff]
      %v45 = vld [vmem:[%s0 + $0x60] sm:$0xff]
      %v46 = vld [vmem:[%s0 + $0x68] sm:$0xff]
      %v47 = vld [vmem:[%s0 + $0x70] sm:$0xff]
      %v48 = vld [vmem:[%s0 + $0x78] sm:$0xff]
      %v49 = vld [vmem:[%s1] sm:$0xff]
      %v50 = vld [vmem:[%s1 + $0x8] sm:$0xff]
      %v51 = vld [vmem:[%s1 + $0x10] sm:$0xff]
      %v52 = vld [vmem:[%s1 + $0x18] sm:$0xff]
      %v53 = vld [vmem:[%s1 + $0x20] sm:$0xff]
      %v54 = vld [vmem:[%s1 + $0x28] sm:$0xff]
      %v55 = vld [vmem:[%s1 + $0x30] sm:$0xff]
      %v56 = vld [vmem:[%s1 + $0x38] sm:$0xff]
      %v57 = vld [vmem:[%s1 + $0x40] sm:$0xff]
      %v58 = vld [vmem:[%s1 + $0x48] sm:$0xff]
      %v59 = vld [vmem:[%s1 + $0x50] sm:$0xff]
      %v60 = vld [vmem:[%s1 + $0x58] sm:$0xff]
      %v61 = vld [vmem:[%s1 + $0x60] sm:$0xff]
      %v62 = vld [vmem:[%s1 + $0x68] sm:$0xff]
      %v63 = vld [vmem:[%s1 + $0x70] sm:$0xff]
      %v64 = vld [vmem:[%s1 + $0x78] sm:$0xff]
      %vm65 = vcmask 261120
      %v67 = vsel %vm65, %v33, 0
      %v70 = vsel %vm65, %v34, 0
      %v73 = vsel %vm65, %v35, 0
      %v76 = vsel %vm65, %v36, 0
      %v79 = vsel %vm65, %v37, 0
      %v82 = vsel %vm65, %v38, 0
      %v85 = vsel %vm65, %v39, 0
      %v88 = vsel %vm65, %v40, 0
      %v91 = vsel %vm65, %v41, 0
      %v94 = vsel %vm65, %v42, 0
      %v97 = vsel %vm65, %v43, 0
      %v100 = vsel %vm65, %v44, 0
      %v103 = vsel %vm65, %v45, 0
      %v106 = vsel %vm65, %v46, 0
      %v109 = vsel %vm65, %v47, 0
      %v112 = vsel %vm65, %v48, 0
      %v115 = vsel %vm65, %v49, 0
      %v118 = vsel %vm65, %v50, 0
      %v121 = vsel %vm65, %v51, 0
      %v124 = vsel %vm65, %v52, 0
      %v127 = vsel %vm65, %v53, 0
      %v130 = vsel %vm65, %v54, 0
      %v133 = vsel %vm65, %v55, 0
      %v136 = vsel %vm65, %v56, 0
      %v139 = vsel %vm65, %v57, 0
      %v142 = vsel %vm65, %v58, 0
      %v145 = vsel %vm65, %v59, 0
      %v148 = vsel %vm65, %v60, 0
      %v151 = vsel %vm65, %v61, 0
      %v154 = vsel %vm65, %v62, 0
      %v157 = vsel %vm65, %v63, 0
      %v160 = vsel %vm65, %v64, 0
      %162 = vmatprep.subr.mxu0 0.0
      %163 = vmatpush1.xpose.msra.mxu0 %v160
      %164 = vmatprep.subr.mxu0 0.0
      %165 = vmatpush1.xpose.msra.mxu0 %v157
      %166 = vmatprep.subr.mxu0 0.0
      %167 = vmatpush1.xpose.msra.mxu0 %v154
      %168 = vmatprep.subr.mxu0 0.0
      %169 = vmatpush1.xpose.msra.mxu0 %v151
      %170 = vmatprep.subr.mxu0 0.0
      %171 = vmatpush1.xpose.msra.mxu0 %v148
      %172 = vmatprep.subr.mxu0 0.0
      %173 = vmatpush1.xpose.msra.mxu0 %v145
      %174 = vmatprep.subr.mxu0 0.0
      %175 = vmatpush1.xpose.msra.mxu0 %v142
      %176 = vmatprep.subr.mxu0 0.0
      %177 = vmatpush1.xpose.msra.mxu0 %v139
      %178 = vmatprep.subr.mxu0 0.0
      %179 = vmatpush1.xpose.msra.mxu0 %v136
      %180 = vmatprep.subr.mxu0 0.0
      %181 = vmatpush1.xpose.msra.mxu0 %v133
      %182 = vmatprep.subr.mxu0 0.0
      %183 = vmatpush1.xpose.msra.mxu0 %v130
      %184 = vmatprep.subr.mxu0 0.0
      %185 = vmatpush1.xpose.msra.mxu0 %v127
      %186 = vmatprep.subr.mxu0 0.0
      %187 = vmatpush1.xpose.msra.mxu0 %v124
      %188 = vmatprep.subr.mxu0 0.0
      %189 = vmatpush1.xpose.msra.mxu0 %v121
      %190 = vmatprep.subr.mxu0 0.0
      %191 = vmatpush1.xpose.msra.mxu0 %v118
      %192 = vmatprep.subr.mxu0 0.0
      %193 = vmatpush1.xpose.msra.mxu0 %v115
      %194 = vmatprep.subr.mxu0 0.0
      %195 = vmatpush2.xpose.msra.mxu0 0.0
      %196 = vmatprep.subr.mxu0 0.0
      %197 = vmatpush2.xpose.msra.mxu0 0.0
      %198 = vmatprep.subr.mxu0 0.0
      %199 = vmatpush2.xpose.msra.mxu0 0.0
      %200 = vmatprep.subr.mxu0 0.0
      %201 = vmatpush2.xpose.msra.mxu0 0.0
      %202 = vmatprep.subr.mxu0 0.0
      %203 = vmatpush2.xpose.msra.mxu0 0.0
      %204 = vmatprep.subr.mxu0 0.0
      %205 = vmatpush2.xpose.msra.mxu0 0.0
      %206 = vmatprep.subr.mxu0 0.0
      %207 = vmatpush2.xpose.msra.mxu0 0.0
      %208 = vmatprep.subr.mxu0 0.0
      %209 = vmatpush2.xpose.msra.mxu0 0.0
      %210 = vmatprep.subr.mxu0 0.0
      %211 = vmatpush2.xpose.msra.mxu0 0.0
      %212 = vmatprep.subr.mxu0 0.0
      %213 = vmatpush2.xpose.msra.mxu0 0.0
      %214 = vmatprep.subr.mxu0 0.0
      %215 = vmatpush2.xpose.msra.mxu0 0.0
      %216 = vmatprep.subr.mxu0 0.0
      %217 = vmatpush2.xpose.msra.mxu0 0.0
      %218 = vmatprep.subr.mxu0 0.0
      %219 = vmatpush2.xpose.msra.mxu0 0.0
      %220 = vmatprep.subr.mxu0 0.0
      %221 = vmatpush2.xpose.msra.mxu0 0.0
      %222 = vmatprep.subr.mxu0 0.0
      %223 = vmatpush2.xpose.msra.mxu0 0.0
      %224 = vmatprep.subr.mxu0 0.0
      %225 = vmatpush2.xpose.msra.mxu0 0.0
      %226 = vmatprep.mubr.f32.mxu0 0.0
      %227 = vmatmul.mubr.f32.gmra.mxu0 %v67
      %v228 = vpop.f32.mrf.mxu0
      %v229 = vadd.f32 0.0, %v228
      %v230 = vpop.f32.mrf.mxu0
      %231 = vmatprep.mubr.f32.mxu0 0.0
      %232 = vmatmul.mubr.f32.gmra.mxu0 %v70
      %v233 = vpop.f32.mrf.mxu0
      %v234 = vadd.f32 0.0, %v233
      %v235 = vpop.f32.mrf.mxu0
      %236 = vmatprep.mubr.f32.mxu0 0.0
      %237 = vmatmul.mubr.f32.gmra.mxu0 %v73
      %v238 = vpop.f32.mrf.mxu0
      %v239 = vadd.f32 0.0, %v238
      %v240 = vpop.f32.mrf.mxu0
      %241 = vmatprep.mubr.f32.mxu0 0.0
      %242 = vmatmul.mubr.f32.gmra.mxu0 %v76
      %v243 = vpop.f32.mrf.mxu0
      %v244 = vadd.f32 0.0, %v243
      %v245 = vpop.f32.mrf.mxu0
      %246 = vmatprep.mubr.f32.mxu0 0.0
      %247 = vmatmul.mubr.f32.gmra.mxu0 %v79
      %v248 = vpop.f32.mrf.mxu0
      %v249 = vadd.f32 0.0, %v248
      %v250 = vpop.f32.mrf.mxu0
      %251 = vmatprep.mubr.f32.mxu0 0.0
      %252 = vmatmul.mubr.f32.gmra.mxu0 %v82
      %v253 = vpop.f32.mrf.mxu0
      %v254 = vadd.f32 0.0, %v253
      %v255 = vpop.f32.mrf.mxu0
      %256 = vmatprep.mubr.f32.mxu0 0.0
      %257 = vmatmul.mubr.f32.gmra.mxu0 %v85
      %v258 = vpop.f32.mrf.mxu0
      %v259 = vadd.f32 0.0, %v258
      %v260 = vpop.f32.mrf.mxu0
      %261 = vmatprep.mubr.f32.mxu0 0.0
      %262 = vmatmul.mubr.f32.gmra.mxu0 %v88
      %v263 = vpop.f32.mrf.mxu0
      %v264 = vadd.f32 0.0, %v263
      %v265 = vpop.f32.mrf.mxu0
      %266 = vmatprep.mubr.f32.mxu0 0.0
      %267 = vmatmul.mubr.f32.gmra.mxu0 %v91
      %v268 = vpop.f32.mrf.mxu0
      %v269 = vadd.f32 0.0, %v268
      %v270 = vpop.f32.mrf.mxu0
      %271 = vmatprep.mubr.f32.mxu0 0.0
      %272 = vmatmul.mubr.f32.gmra.mxu0 %v94
      %v273 = vpop.f32.mrf.mxu0
      %v274 = vadd.f32 0.0, %v273
      %v275 = vpop.f32.mrf.mxu0
      %276 = vmatprep.mubr.f32.mxu0 0.0
      %277 = vmatmul.mubr.f32.gmra.mxu0 %v97
      %v278 = vpop.f32.mrf.mxu0
      %v279 = vadd.f32 0.0, %v278
      %v280 = vpop.f32.mrf.mxu0
      %281 = vmatprep.mubr.f32.mxu0 0.0
      %282 = vmatmul.mubr.f32.gmra.mxu0 %v100
      %v283 = vpop.f32.mrf.mxu0
      %v284 = vadd.f32 0.0, %v283
      %v285 = vpop.f32.mrf.mxu0
      %286 = vmatprep.mubr.f32.mxu0 0.0
      %287 = vmatmul.mubr.f32.gmra.mxu0 %v103
      %v288 = vpop.f32.mrf.mxu0
      %v289 = vadd.f32 0.0, %v288
      %v290 = vpop.f32.mrf.mxu0
      %291 = vmatprep.mubr.f32.mxu0 0.0
      %292 = vmatmul.mubr.f32.gmra.mxu0 %v106
      %v293 = vpop.f32.mrf.mxu0
      %v294 = vadd.f32 0.0, %v293
      %v295 = vpop.f32.mrf.mxu0
      %296 = vmatprep.mubr.f32.mxu0 0.0
      %297 = vmatmul.mubr.f32.gmra.mxu0 %v109
      %v298 = vpop.f32.mrf.mxu0
      %v299 = vadd.f32 0.0, %v298
      %v300 = vpop.f32.mrf.mxu0
      %301 = vmatprep.mubr.f32.mxu0 0.0
      %302 = vmatmul.mubr.f32.gmra.mxu0 %v112
      %v303 = vpop.f32.mrf.mxu0
      %v304 = vadd.f32 0.0, %v303
      %v305 = vpop.f32.mrf.mxu0
      %306 = vdwg.mxu0
      %v307 = vld [vmem:[%s4] sm:$0xff]
      %v308 = vld [vmem:[%s4 + $0x8] sm:$0xff]
      %v309 = vld [vmem:[%s4 + $0x10] sm:$0xff]
      %v310 = vld [vmem:[%s4 + $0x18] sm:$0xff]
      %v311 = vld [vmem:[%s4 + $0x20] sm:$0xff]
      %v312 = vld [vmem:[%s4 + $0x28] sm:$0xff]
      %v313 = vld [vmem:[%s4 + $0x30] sm:$0xff]
      %v314 = vld [vmem:[%s4 + $0x38] sm:$0xff]
      %v315 = vld [vmem:[%s4 + $0x40] sm:$0xff]
      %v316 = vld [vmem:[%s4 + $0x48] sm:$0xff]
      %v317 = vld [vmem:[%s4 + $0x50] sm:$0xff]
      %v318 = vld [vmem:[%s4 + $0x58] sm:$0xff]
      %v319 = vld [vmem:[%s4 + $0x60] sm:$0xff]
      %v320 = vld [vmem:[%s4 + $0x68] sm:$0xff]
      %v321 = vld [vmem:[%s4 + $0x70] sm:$0xff]
      %v322 = vld [vmem:[%s4 + $0x78] sm:$0xff]
      %v323 = vld [vmem:[%s5] sm:$0x1]
      %325 = vset.pattern.permute.xlu0 0
      %326 = vperm.xlu0 %325, %v307
      %v327 = vpop.permute.xlu0 %326
      %330 = vset.pattern.permute.xlu0 0
      %331 = vperm.xlu0 %330, %v308
      %v332 = vpop.permute.xlu0 %331
      %335 = vset.pattern.permute.xlu0 0
      %336 = vperm.xlu0 %335, %v309
      %v337 = vpop.permute.xlu0 %336
      %340 = vset.pattern.permute.xlu0 0
      %341 = vperm.xlu0 %340, %v310
      %v342 = vpop.permute.xlu0 %341
      %345 = vset.pattern.permute.xlu0 0
      %346 = vperm.xlu0 %345, %v311
      %v347 = vpop.permute.xlu0 %346
      %350 = vset.pattern.permute.xlu0 0
      %351 = vperm.xlu0 %350, %v312
      %v352 = vpop.permute.xlu0 %351
      %355 = vset.pattern.permute.xlu0 0
      %356 = vperm.xlu0 %355, %v313
      %v357 = vpop.permute.xlu0 %356
      %360 = vset.pattern.permute.xlu0 0
      %361 = vperm.xlu0 %360, %v314
      %v362 = vpop.permute.xlu0 %361
      %365 = vset.pattern.permute.xlu0 0
      %366 = vperm.xlu0 %365, %v315
      %v367 = vpop.permute.xlu0 %366
      %370 = vset.pattern.permute.xlu0 0
      %371 = vperm.xlu0 %370, %v316
      %v372 = vpop.permute.xlu0 %371
      %375 = vset.pattern.permute.xlu0 0
      %376 = vperm.xlu0 %375, %v317
      %v377 = vpop.permute.xlu0 %376
      %380 = vset.pattern.permute.xlu0 0
      %381 = vperm.xlu0 %380, %v318
      %v382 = vpop.permute.xlu0 %381
      %385 = vset.pattern.permute.xlu0 0
      %386 = vperm.xlu0 %385, %v319
      %v387 = vpop.permute.xlu0 %386
      %390 = vset.pattern.permute.xlu0 0
      %391 = vperm.xlu0 %390, %v320
      %v392 = vpop.permute.xlu0 %391
      %395 = vset.pattern.permute.xlu0 0
      %396 = vperm.xlu0 %395, %v321
      %v397 = vpop.permute.xlu0 %396
      %400 = vset.pattern.permute.xlu0 0
      %401 = vperm.xlu0 %400, %v322
      %v402 = vpop.permute.xlu0 %401
      %v405 = vlaneseq
      %v406 = vshrl.u32 %v405, 7
      %v407 = vsub.s32 0, %v406
      %v408 = vrot.slane %v323, %v407
      %v410 = vadd.f32 %v327, %v408
      %v411 = vadd.f32 %v332, %v408
      %v412 = vadd.f32 %v337, %v408
      %v413 = vadd.f32 %v342, %v408
      %v414 = vadd.f32 %v347, %v408
      %v415 = vadd.f32 %v352, %v408
      %v416 = vadd.f32 %v357, %v408
      %v417 = vadd.f32 %v362, %v408
      %v418 = vadd.f32 %v367, %v408
      %v419 = vadd.f32 %v372, %v408
      %v420 = vadd.f32 %v377, %v408
      %v421 = vadd.f32 %v382, %v408
      %v422 = vadd.f32 %v387, %v408
      %v423 = vadd.f32 %v392, %v408
      %v424 = vadd.f32 %v397, %v408
      %v425 = vadd.f32 %v402, %v408
      %v426 = vmul.f32 %v229, 2.0
      %v427 = vmul.f32 %v234, 2.0
      %v428 = vmul.f32 %v239, 2.0
      %v429 = vmul.f32 %v244, 2.0
      %v430 = vmul.f32 %v249, 2.0
      %v431 = vmul.f32 %v254, 2.0
      %v432 = vmul.f32 %v259, 2.0
      %v433 = vmul.f32 %v264, 2.0
      %v434 = vmul.f32 %v269, 2.0
      %v435 = vmul.f32 %v274, 2.0
      %v436 = vmul.f32 %v279, 2.0
      %v437 = vmul.f32 %v284, 2.0
      %v438 = vmul.f32 %v289, 2.0
      %v439 = vmul.f32 %v294, 2.0
      %v440 = vmul.f32 %v299, 2.0
      %v441 = vmul.f32 %v304, 2.0
      %v442 = vsub.f32 %v410, %v426
      %v443 = vsub.f32 %v411, %v427
      %v444 = vsub.f32 %v412, %v428
      %v445 = vsub.f32 %v413, %v429
      %v446 = vsub.f32 %v414, %v430
      %v447 = vsub.f32 %v415, %v431
      %v448 = vsub.f32 %v416, %v432
      %v449 = vsub.f32 %v417, %v433
      %v450 = vsub.f32 %v418, %v434
      %v451 = vsub.f32 %v419, %v435
      %v452 = vsub.f32 %v420, %v436
      %v453 = vsub.f32 %v421, %v437
      %v454 = vsub.f32 %v422, %v438
      %v455 = vsub.f32 %v423, %v439
      %v456 = vsub.f32 %v424, %v440
      %v457 = vsub.f32 %v425, %v441
      %v458 = vmax.f32 %v442, 0.0
      %v459 = vmax.f32 %v443, 0.0
      %v460 = vmax.f32 %v444, 0.0
      %v461 = vmax.f32 %v445, 0.0
      %v462 = vmax.f32 %v446, 0.0
      %v463 = vmax.f32 %v447, 0.0
      %v464 = vmax.f32 %v448, 0.0
      %v465 = vmax.f32 %v449, 0.0
      %v466 = vmax.f32 %v450, 0.0
      %v467 = vmax.f32 %v451, 0.0
      %v468 = vmax.f32 %v452, 0.0
      %v469 = vmax.f32 %v453, 0.0
      %v470 = vmax.f32 %v454, 0.0
      %v471 = vmax.f32 %v455, 0.0
      %v472 = vmax.f32 %v456, 0.0
      %v473 = vmax.f32 %v457, 0.0
      %v474 = vrsqrt.pop %v458
      %v475 = vmul.f32 %v458, %v474
      %vm476 = vcmp.eq.f32.partialorder %v458, inf
      %v477 = vsel %vm476, %v458, %v475
      %vm478 = vcmp.eq.f32.partialorder %v458, 0.0
      %v479 = vand.u32 %v458, 2147483648
      %v480 = vsel %vm478, %v479, %v477
      %v481 = vrsqrt.pop %v459
      %v482 = vmul.f32 %v459, %v481
      %vm483 = vcmp.eq.f32.partialorder %v459, inf
      %v484 = vsel %vm483, %v459, %v482
      %vm485 = vcmp.eq.f32.partialorder %v459, 0.0
      %v486 = vand.u32 %v459, 2147483648
      %v487 = vsel %vm485, %v486, %v484
      %v488 = vrsqrt.pop %v460
      %v489 = vmul.f32 %v460, %v488
      %vm490 = vcmp.eq.f32.partialorder %v460, inf
      %v491 = vsel %vm490, %v460, %v489
      %vm492 = vcmp.eq.f32.partialorder %v460, 0.0
      %v493 = vand.u32 %v460, 2147483648
      %v494 = vsel %vm492, %v493, %v491
      %v495 = vrsqrt.pop %v461
      %v496 = vmul.f32 %v461, %v495
      %vm497 = vcmp.eq.f32.partialorder %v461, inf
      %v498 = vsel %vm497, %v461, %v496
      %vm499 = vcmp.eq.f32.partialorder %v461, 0.0
      %v500 = vand.u32 %v461, 2147483648
      %v501 = vsel %vm499, %v500, %v498
      %v502 = vrsqrt.pop %v462
      %v503 = vmul.f32 %v462, %v502
      %vm504 = vcmp.eq.f32.partialorder %v462, inf
      %v505 = vsel %vm504, %v462, %v503
      %vm506 = vcmp.eq.f32.partialorder %v462, 0.0
      %v507 = vand.u32 %v462, 2147483648
      %v508 = vsel %vm506, %v507, %v505
      %v509 = vrsqrt.pop %v463
      %v510 = vmul.f32 %v463, %v509
      %vm511 = vcmp.eq.f32.partialorder %v463, inf
      %v512 = vsel %vm511, %v463, %v510
      %vm513 = vcmp.eq.f32.partialorder %v463, 0.0
      %v514 = vand.u32 %v463, 2147483648
      %v515 = vsel %vm513, %v514, %v512
      %v516 = vrsqrt.pop %v464
      %v517 = vmul.f32 %v464, %v516
      %vm518 = vcmp.eq.f32.partialorder %v464, inf
      %v519 = vsel %vm518, %v464, %v517
      %vm520 = vcmp.eq.f32.partialorder %v464, 0.0
      %v521 = vand.u32 %v464, 2147483648
      %v522 = vsel %vm520, %v521, %v519
      %v523 = vrsqrt.pop %v465
      %v524 = vmul.f32 %v465, %v523
      %vm525 = vcmp.eq.f32.partialorder %v465, inf
      %v526 = vsel %vm525, %v465, %v524
      %vm527 = vcmp.eq.f32.partialorder %v465, 0.0
      %v528 = vand.u32 %v465, 2147483648
      %v529 = vsel %vm527, %v528, %v526
      %v530 = vrsqrt.pop %v466
      %v531 = vmul.f32 %v466, %v530
      %vm532 = vcmp.eq.f32.partialorder %v466, inf
      %v533 = vsel %vm532, %v466, %v531
      %vm534 = vcmp.eq.f32.partialorder %v466, 0.0
      %v535 = vand.u32 %v466, 2147483648
      %v536 = vsel %vm534, %v535, %v533
      %v537 = vrsqrt.pop %v467
      %v538 = vmul.f32 %v467, %v537
      %vm539 = vcmp.eq.f32.partialorder %v467, inf
      %v540 = vsel %vm539, %v467, %v538
      %vm541 = vcmp.eq.f32.partialorder %v467, 0.0
      %v542 = vand.u32 %v467, 2147483648
      %v543 = vsel %vm541, %v542, %v540
      %v544 = vrsqrt.pop %v468
      %v545 = vmul.f32 %v468, %v544
      %vm546 = vcmp.eq.f32.partialorder %v468, inf
      %v547 = vsel %vm546, %v468, %v545
      %vm548 = vcmp.eq.f32.partialorder %v468, 0.0
      %v549 = vand.u32 %v468, 2147483648
      %v550 = vsel %vm548, %v549, %v547
      %v551 = vrsqrt.pop %v469
      %v552 = vmul.f32 %v469, %v551
      %vm553 = vcmp.eq.f32.partialorder %v469, inf
      %v554 = vsel %vm553, %v469, %v552
      %vm555 = vcmp.eq.f32.partialorder %v469, 0.0
      %v556 = vand.u32 %v469, 2147483648
      %v557 = vsel %vm555, %v556, %v554
      %v558 = vrsqrt.pop %v470
      %v559 = vmul.f32 %v470, %v558
      %vm560 = vcmp.eq.f32.partialorder %v470, inf
      %v561 = vsel %vm560, %v470, %v559
      %vm562 = vcmp.eq.f32.partialorder %v470, 0.0
      %v563 = vand.u32 %v470, 2147483648
      %v564 = vsel %vm562, %v563, %v561
      %v565 = vrsqrt.pop %v471
      %v566 = vmul.f32 %v471, %v565
      %vm567 = vcmp.eq.f32.partialorder %v471, inf
      %v568 = vsel %vm567, %v471, %v566
      %vm569 = vcmp.eq.f32.partialorder %v471, 0.0
      %v570 = vand.u32 %v471, 2147483648
      %v571 = vsel %vm569, %v570, %v568
      %v572 = vrsqrt.pop %v472
      %v573 = vmul.f32 %v472, %v572
      %vm574 = vcmp.eq.f32.partialorder %v472, inf
      %v575 = vsel %vm574, %v472, %v573
      %vm576 = vcmp.eq.f32.partialorder %v472, 0.0
      %v577 = vand.u32 %v472, 2147483648
      %v578 = vsel %vm576, %v577, %v575
      %v579 = vrsqrt.pop %v473
      %v580 = vmul.f32 %v473, %v579
      %vm581 = vcmp.eq.f32.partialorder %v473, inf
      %v582 = vsel %vm581, %v473, %v580
      %vm583 = vcmp.eq.f32.partialorder %v473, 0.0
      %v584 = vand.u32 %v473, 2147483648
      %v585 = vsel %vm583, %v584, %v582
      %v586 = vsub.f32 1.0, %v480
      %v587 = vsub.f32 1.0, %v487
      %v588 = vsub.f32 1.0, %v494
      %v589 = vsub.f32 1.0, %v501
      %v590 = vsub.f32 1.0, %v508
      %v591 = vsub.f32 1.0, %v515
      %v592 = vsub.f32 1.0, %v522
      %v593 = vsub.f32 1.0, %v529
      %v594 = vsub.f32 1.0, %v536
      %v595 = vsub.f32 1.0, %v543
      %v596 = vsub.f32 1.0, %v550
      %v597 = vsub.f32 1.0, %v557
      %v598 = vsub.f32 1.0, %v564
      %v599 = vsub.f32 1.0, %v571
      %v600 = vsub.f32 1.0, %v578
      %v601 = vsub.f32 1.0, %v585
      %v602 = vmax.f32 %v586, 0.0
      %v603 = vmax.f32 %v587, 0.0
      %v604 = vmax.f32 %v588, 0.0
      %v605 = vmax.f32 %v589, 0.0
      %v606 = vmax.f32 %v590, 0.0
      %v607 = vmax.f32 %v591, 0.0
      %v608 = vmax.f32 %v592, 0.0
      %v609 = vmax.f32 %v593, 0.0
      %v610 = vmax.f32 %v594, 0.0
      %v611 = vmax.f32 %v595, 0.0
      %v612 = vmax.f32 %v596, 0.0
      %v613 = vmax.f32 %v597, 0.0
      %v614 = vmax.f32 %v598, 0.0
      %v615 = vmax.f32 %v599, 0.0
      %v616 = vmax.f32 %v600, 0.0
      %v617 = vmax.f32 %v601, 0.0
      %v618 = vmul.f32 %v602, %v602
      %v619 = vmul.f32 %v603, %v603
      %v620 = vmul.f32 %v604, %v604
      %v621 = vmul.f32 %v605, %v605
      %v622 = vmul.f32 %v606, %v606
      %v623 = vmul.f32 %v607, %v607
      %v624 = vmul.f32 %v608, %v608
      %v625 = vmul.f32 %v609, %v609
      %v626 = vmul.f32 %v610, %v610
      %v627 = vmul.f32 %v611, %v611
      %v628 = vmul.f32 %v612, %v612
      %v629 = vmul.f32 %v613, %v613
      %v630 = vmul.f32 %v614, %v614
      %v631 = vmul.f32 %v615, %v615
      %v632 = vmul.f32 %v616, %v616
      %v633 = vmul.f32 %v617, %v617
      %v634 = vld [vmem:[%s2] sm:$0xff]
      %v635 = vld [vmem:[%s2 + $0x8] sm:$0xff]
      %v636 = vld [vmem:[%s2 + $0x10] sm:$0xff]
      %v637 = vld [vmem:[%s2 + $0x18] sm:$0xff]
      %v638 = vld [vmem:[%s2 + $0x20] sm:$0xff]
      %v639 = vld [vmem:[%s2 + $0x28] sm:$0xff]
      %v640 = vld [vmem:[%s2 + $0x30] sm:$0xff]
      %v641 = vld [vmem:[%s2 + $0x38] sm:$0xff]
      %v642 = vld [vmem:[%s2 + $0x40] sm:$0xff]
      %v643 = vld [vmem:[%s2 + $0x48] sm:$0xff]
      %v644 = vld [vmem:[%s2 + $0x50] sm:$0xff]
      %v645 = vld [vmem:[%s2 + $0x58] sm:$0xff]
      %v646 = vld [vmem:[%s2 + $0x60] sm:$0xff]
      %v647 = vld [vmem:[%s2 + $0x68] sm:$0xff]
      %v648 = vld [vmem:[%s2 + $0x70] sm:$0xff]
      %v649 = vld [vmem:[%s2 + $0x78] sm:$0xff]
      %v650 = vld [vmem:[%s3] sm:$0x1]
      %651 = vset.pattern.permute.xlu0 0
      %652 = vperm.xlu0 %651, %v634
      %v653 = vpop.permute.xlu0 %652
      %654 = vset.pattern.permute.xlu0 0
      %655 = vperm.xlu0 %654, %v635
      %v656 = vpop.permute.xlu0 %655
      %657 = vset.pattern.permute.xlu0 0
      %658 = vperm.xlu0 %657, %v636
      %v659 = vpop.permute.xlu0 %658
      %660 = vset.pattern.permute.xlu0 0
      %661 = vperm.xlu0 %660, %v637
      %v662 = vpop.permute.xlu0 %661
      %663 = vset.pattern.permute.xlu0 0
      %664 = vperm.xlu0 %663, %v638
      %v665 = vpop.permute.xlu0 %664
      %666 = vset.pattern.permute.xlu0 0
      %667 = vperm.xlu0 %666, %v639
      %v668 = vpop.permute.xlu0 %667
      %669 = vset.pattern.permute.xlu0 0
      %670 = vperm.xlu0 %669, %v640
      %v671 = vpop.permute.xlu0 %670
      %672 = vset.pattern.permute.xlu0 0
      %673 = vperm.xlu0 %672, %v641
      %v674 = vpop.permute.xlu0 %673
      %675 = vset.pattern.permute.xlu0 0
      %676 = vperm.xlu0 %675, %v642
      %v677 = vpop.permute.xlu0 %676
      %678 = vset.pattern.permute.xlu0 0
      %679 = vperm.xlu0 %678, %v643
      %v680 = vpop.permute.xlu0 %679
      %681 = vset.pattern.permute.xlu0 0
      %682 = vperm.xlu0 %681, %v644
      %v683 = vpop.permute.xlu0 %682
      %684 = vset.pattern.permute.xlu0 0
      %685 = vperm.xlu0 %684, %v645
      %v686 = vpop.permute.xlu0 %685
      %687 = vset.pattern.permute.xlu0 0
      %688 = vperm.xlu0 %687, %v646
      %v689 = vpop.permute.xlu0 %688
      %690 = vset.pattern.permute.xlu0 0
      %691 = vperm.xlu0 %690, %v647
      %v692 = vpop.permute.xlu0 %691
      %693 = vset.pattern.permute.xlu0 0
      %694 = vperm.xlu0 %693, %v648
      %v695 = vpop.permute.xlu0 %694
      %696 = vset.pattern.permute.xlu0 0
      %697 = vperm.xlu0 %696, %v649
      %v698 = vpop.permute.xlu0 %697
      %v699 = vlaneseq
      %v700 = vshrl.u32 %v699, 7
      %v701 = vsub.s32 0, %v700
      %v702 = vrot.slane %v650, %v701
      %vm703 = vcmp.eq.s32.totalorder %v653, %v702
      %vm704 = vcmp.eq.s32.totalorder %v656, %v702
      %vm705 = vcmp.eq.s32.totalorder %v659, %v702
      %vm706 = vcmp.eq.s32.totalorder %v662, %v702
      %vm707 = vcmp.eq.s32.totalorder %v665, %v702
      %vm708 = vcmp.eq.s32.totalorder %v668, %v702
      %vm709 = vcmp.eq.s32.totalorder %v671, %v702
      %vm710 = vcmp.eq.s32.totalorder %v674, %v702
      %vm711 = vcmp.eq.s32.totalorder %v677, %v702
      %vm712 = vcmp.eq.s32.totalorder %v680, %v702
      %vm713 = vcmp.eq.s32.totalorder %v683, %v702
      %vm714 = vcmp.eq.s32.totalorder %v686, %v702
      %vm715 = vcmp.eq.s32.totalorder %v689, %v702
      %vm716 = vcmp.eq.s32.totalorder %v692, %v702
      %vm717 = vcmp.eq.s32.totalorder %v695, %v702
      %vm718 = vcmp.eq.s32.totalorder %v698, %v702
      %v719 = vsel %vm703, %v458, %v618
      %v720 = vsel %vm704, %v459, %v619
      %v721 = vsel %vm705, %v460, %v620
      %v722 = vsel %vm706, %v461, %v621
      %v723 = vsel %vm707, %v462, %v622
      %v724 = vsel %vm708, %v463, %v623
      %v725 = vsel %vm709, %v464, %v624
      %v726 = vsel %vm710, %v465, %v625
      %v727 = vsel %vm711, %v466, %v626
      %v728 = vsel %vm712, %v467, %v627
      %v729 = vsel %vm713, %v468, %v628
      %v730 = vsel %vm714, %v469, %v629
      %v731 = vsel %vm715, %v470, %v630
      %v732 = vsel %vm716, %v471, %v631
      %v733 = vsel %vm717, %v472, %v632
      %v734 = vsel %vm718, %v473, %v633
      %s735 = smul.u32 0, 128
      %v736 = vlaneseq
      %v737 = vshrl.u32 %v736, 7
      %v738 = vadd.s32 %v737, 8
      %v739 = vadd.s32 %v737, 16
      %v740 = vadd.s32 %v737, 24
      %v741 = vadd.s32 %v737, 32
      %v742 = vadd.s32 %v737, 40
      %v743 = vadd.s32 %v737, 48
      %v744 = vadd.s32 %v737, 56
      %v745 = vadd.s32 %v737, 64
      %v746 = vadd.s32 %v737, 72
      %v747 = vadd.s32 %v737, 80
      %v748 = vadd.s32 %v737, 88
      %v749 = vadd.s32 %v737, 96
      %v750 = vadd.s32 %v737, 104
      %v751 = vadd.s32 %v737, 112
      %v752 = vadd.s32 %v737, 120
      %v753 = vstv %s735
      %v754 = vadd.s32 %v753, %v737
      %v755 = vadd.s32 %v753, %v738
      %v756 = vadd.s32 %v753, %v739
      %v757 = vadd.s32 %v753, %v740
      %v758 = vadd.s32 %v753, %v741
      %v759 = vadd.s32 %v753, %v742
      %v760 = vadd.s32 %v753, %v743
      %v761 = vadd.s32 %v753, %v744
      %v762 = vadd.s32 %v753, %v745
      %v763 = vadd.s32 %v753, %v746
      %v764 = vadd.s32 %v753, %v747
      %v765 = vadd.s32 %v753, %v748
      %v766 = vadd.s32 %v753, %v749
      %v767 = vadd.s32 %v753, %v750
      %v768 = vadd.s32 %v753, %v751
      %v769 = vadd.s32 %v753, %v752
      %s770 = smul.u32 0, 128
      %v771 = vlaneseq
      %v772 = vand.u32 %v771, 127
      %v773 = vstv %s770
      %v774 = vadd.s32 %v773, %v772
      %vm775 = vcmp.gt.s32.totalorder %v774, %v754
      %vm776 = vcmp.gt.s32.totalorder %v774, %v755
      %vm777 = vcmp.gt.s32.totalorder %v774, %v756
      %vm778 = vcmp.gt.s32.totalorder %v774, %v757
      %vm779 = vcmp.gt.s32.totalorder %v774, %v758
      %vm780 = vcmp.gt.s32.totalorder %v774, %v759
      %vm781 = vcmp.gt.s32.totalorder %v774, %v760
      %vm782 = vcmp.gt.s32.totalorder %v774, %v761
      %vm783 = vcmp.gt.s32.totalorder %v774, %v762
      %vm784 = vcmp.gt.s32.totalorder %v774, %v763
      %vm785 = vcmp.gt.s32.totalorder %v774, %v764
      %vm786 = vcmp.gt.s32.totalorder %v774, %v765
      %vm787 = vcmp.gt.s32.totalorder %v774, %v766
      %vm788 = vcmp.gt.s32.totalorder %v774, %v767
      %vm789 = vcmp.gt.s32.totalorder %v774, %v768
      %vm790 = vcmp.gt.s32.totalorder %v774, %v769
      %vm791 = vcmp.lt.s32.totalorder %v774, 8
      %vm792 = vmand %vm775, %vm791
      %vm793 = vmand %vm776, %vm791
      %vm794 = vmand %vm777, %vm791
      %vm795 = vmand %vm778, %vm791
      %vm796 = vmand %vm779, %vm791
      %vm797 = vmand %vm780, %vm791
      %vm798 = vmand %vm781, %vm791
      %vm799 = vmand %vm782, %vm791
      %vm800 = vmand %vm783, %vm791
      %vm801 = vmand %vm784, %vm791
      %vm802 = vmand %vm785, %vm791
      %vm803 = vmand %vm786, %vm791
      %vm804 = vmand %vm787, %vm791
      %vm805 = vmand %vm788, %vm791
      %vm806 = vmand %vm789, %vm791
      %vm807 = vmand %vm790, %vm791
      %v808 = vsel %vm792, %v719, 0.0
      %v809 = vsel %vm793, %v720, 0.0
      %v810 = vsel %vm794, %v721, 0.0
      %v811 = vsel %vm795, %v722, 0.0
      %v812 = vsel %vm796, %v723, 0.0
      %v813 = vsel %vm797, %v724, 0.0
      %v814 = vsel %vm798, %v725, 0.0
      %v815 = vsel %vm799, %v726, 0.0
      %v816 = vsel %vm800, %v727, 0.0
      %v817 = vsel %vm801, %v728, 0.0
      %v818 = vsel %vm802, %v729, 0.0
      %v819 = vsel %vm803, %v730, 0.0
      %v820 = vsel %vm804, %v731, 0.0
      %v821 = vsel %vm805, %v732, 0.0
      %v822 = vsel %vm806, %v733, 0.0
      %v823 = vsel %vm807, %v734, 0.0
      %v824 = vadd.f32 %v808, %v809
      %v825 = vadd.f32 %v824, %v810
      %v826 = vadd.f32 %v825, %v811
      %v827 = vadd.f32 %v826, %v812
      %v828 = vadd.f32 %v827, %v813
      %v829 = vadd.f32 %v828, %v814
      %v830 = vadd.f32 %v829, %v815
      %v831 = vadd.f32 %v830, %v816
      %v832 = vadd.f32 %v831, %v817
      %v833 = vadd.f32 %v832, %v818
      %v834 = vadd.f32 %v833, %v819
      %v835 = vadd.f32 %v834, %v820
      %v836 = vadd.f32 %v835, %v821
      %v837 = vadd.f32 %v836, %v822
      %v838 = vadd.f32 %v837, %v823
      %v839 = vrot.slane %v838, 4
      %v840 = vadd.f32 %v838, %v839
      %v841 = vrot.slane %v840, 2
      %v842 = vadd.f32 %v840, %v841
      %v843 = vrot.slane %v842, 1
      %v844 = vadd.f32 %v842, %v843
      %v845 = vld [vmem:[#allocation2] sm:$0x1]
      %v846 = vadd.f32 %v845, %v844
      %847 = vst [vmem:[#allocation2] sm:$0x1] %v846
    $region33: #{tpu_custom_call.1} parent=1 // pred_fallthru
      _
    // Predicated region
    $region34: #{tpu_custom_call.1} parent=1 // pred_check
      _
    $region35: #{tpu_custom_call.1} parent=1 // pred_check_branch
      %849 = sbr.rel (0) target = $region37
    $region36: #{tpu_custom_call.1} parent=1 // pred_region
      %s851 = ssub.s32 16, 16
      %852 = vsyncadd [#allocation3], %s851
      %s854 = sshll.u32 [#allocation2], 4
      %s855 = int_to_ptr.vmem [resolvable:$true] %s854
      %857 = dma.vmem_to_hbm [thread:$0]  %s855, 16, %s6, [#allocation3]
    $region37: #{tpu_custom_call.1} parent=1 // pred_fallthru
      _
    // Predicated region
    $region38: #{tpu_custom_call.1} parent=1 // pred_check
      _
    $region39: #{tpu_custom_call.1} parent=1 // pred_check_branch
      %859 = sbr.rel (0) target = $region41
    $region40: #{tpu_custom_call.1} parent=1 // pred_region
      %860 = dma.done [#allocation3], 16
    $region41: #{tpu_custom_call.1} parent=1 // pred_fallthru
      _
    %861 = vsyncpa [#allocation3], 1

</llo_original>
